<compile_context>
chip_gen: v7x
topology: tpu7x:2x2x1
jax: 0.10.0
libtpu: 0.0.40
codegen_flags: <defaults>
</compile_context>

<pallas_src>
import jax
import jax.numpy as jnp
from jax.experimental import pallas as pl
from jax.experimental.pallas import tpu as pltpu


LANES = 128      # TPU lane width (last dim)
SUBLANES = 8     # f32 sublane granularity (second-to-last dim)


def _fake_ansatz_kernel(consts_ref, x_ref, y_ref, ux_ref, uy_ref):
    """SoA batched body.

    consts_ref: (2,) f32 in SMEM  -> [c_x, c_y]
    x_ref, y_ref: (block_rows, 128) f32 in VMEM (one coordinate per lane)
    ux_ref, uy_ref: (block_rows, 128) f32 in VMEM
        ux = c_x * x^2 * y,  uy = c_y * x * y^2
    """
    c_x = consts_ref[0]
    c_y = consts_ref[1]
    x = x_ref[...]
    y = y_ref[...]
    xy = x * y
    ux_ref[...] = c_x * (x * xy)
    uy_ref[...] = c_y * (y * xy)


def transformed_fake_ansatz_batched(coords, x_parameters, constants,
                                    block_rows=256):
    """Evaluate the fake ansatz at many points.

    coords:       (N, 2) f32 -> rows of [x, y]
    x_parameters: unused (signature parity with the PyTorch module)
    constants:    (2,) f32  -> [constant_displacement_x, constant_displacement_y]
    returns:      (N, 2) f32 -> rows of [c_x * x^2*y, c_y * x*y^2]
    """
    del x_parameters  # unused in the reference forward pass
    coords = jnp.asarray(coords, jnp.float32)
    consts = jnp.asarray(constants, jnp.float32).reshape(2)
    n = coords.shape[0]

    # SoA split in the wrapper (layout plumbing, fused by XLA).
    x = coords[:, 0]
    y = coords[:, 1]

    # Pad N up to a whole number of (block_rows, 128) lane-dense tiles.
    rows = max(pl.cdiv(n, LANES), 1)
    rows = pl.cdiv(rows, SUBLANES) * SUBLANES
    block_rows = min(block_rows, rows)            # block_rows stays a multiple of 8
    rows = pl.cdiv(rows, block_rows) * block_rows
    pad = rows * LANES - n
    x2d = jnp.pad(x, (0, pad)).reshape(rows, LANES)
    y2d = jnp.pad(y, (0, pad)).reshape(rows, LANES)

    grid = (rows // block_rows,)
    tile_spec = pl.BlockSpec((block_rows, LANES), lambda i: (i, 0))

    ux, uy = pl.pallas_call(
        _fake_ansatz_kernel,
        out_shape=(
            jax.ShapeDtypeStruct((rows, LANES), jnp.float32),
            jax.ShapeDtypeStruct((rows, LANES), jnp.float32),
        ),
        grid=grid,
        in_specs=[
            # constants: two scalars in SMEM, shared (untiled) across the grid
            pl.BlockSpec(memory_space=pltpu.MemorySpace.SMEM),
            tile_spec,   # x
            tile_spec,   # y
        ],
        out_specs=(tile_spec, tile_spec),
        compiler_params=pltpu.CompilerParams(
            dimension_semantics=("parallel",),
        ),
    )(consts, x2d, y2d)

    return jnp.stack([ux.reshape(-1)[:n], uy.reshape(-1)[:n]], axis=-1)


def transformed_fake_ansatz(x_coordinates, x_parameters, constants):
    """Module forward: single point, x_coordinates = [x, y] of shape (2,)."""
    coords = jnp.asarray(x_coordinates, jnp.float32).reshape(1, 2)
    out = transformed_fake_ansatz_batched(coords, x_parameters, constants)
    return out.reshape(2)


def _reference(coords, constants):
    coords = jnp.asarray(coords, jnp.float32)
    x = coords[..., 0]
    y = coords[..., 1]
    return jnp.asarray(constants, jnp.float32) * jnp.stack(
        [x * x * y, x * y * y], axis=-1)


if __name__ == "__main__":
    # Deterministic "module parameters" (from __init__ arguments).
    constant_displacement_x = 2.0
    constant_displacement_y = -0.5
    constants = jnp.array(
        [constant_displacement_x, constant_displacement_y], dtype=jnp.float32
    )

    key = jax.random.PRNGKey(0)
    k_coord, k_param, k_batch = jax.random.split(key, 3)

    # 1) Single-point forward (the original module signature).
    x_coordinates = jax.random.uniform(k_coord, (2,), dtype=jnp.float32)
    x_parameters = jax.random.uniform(k_param, (2,), dtype=jnp.float32)  # unused
    out_single = transformed_fake_ansatz(x_coordinates, x_parameters, constants)
    out_single = jax.block_until_ready(out_single)
    ref_single = _reference(x_coordinates, constants)
    assert out_single.shape == (2,)
    assert jnp.allclose(out_single, ref_single, rtol=1e-6, atol=1e-6), (
        out_single, ref_single)

    # 2) Batched evaluation (the case the Pallas kernel is actually for).
    n_points = 300
    coords_batch = jax.random.uniform(k_batch, (n_points, 2), dtype=jnp.float32)
    out_batch = transformed_fake_ansatz_batched(coords_batch, None, constants)
    out_batch = jax.block_until_ready(out_batch)
    ref_batch = _reference(coords_batch, constants)
    assert out_batch.shape == (n_points, 2)
    assert jnp.allclose(out_batch, ref_batch, rtol=1e-6, atol=1e-6)

    print("KERNEL_OK")
</pallas_src>

<mosaic_0001>
module attributes {stable_mosaic.version = 11 : i64} {
  func.func @_fake_ansatz_kernel(%arg0: i32, %arg1: memref<2xf32, #tpu.memory_space<smem>>, %arg2: memref<8x128xf32, #tpu.memory_space<vmem>>, %arg3: memref<8x128xf32, #tpu.memory_space<vmem>>, %arg4: memref<8x128xf32, #tpu.memory_space<vmem>>, %arg5: memref<8x128xf32, #tpu.memory_space<vmem>>) attributes {dimension_semantics = [#tpu.dimension_semantics<parallel>], iteration_bounds = array<i64: 1>, scalar_prefetch = 0 : i64, scratch_operands = 0 : i64, tpu.core_type = #tpu.core_type<tc>, window_params = [{transform_indices = @transform_0, window_bounds = array<i64: 2>}, {transform_indices = @transform_1, window_bounds = array<i64: 8, 128>}, {transform_indices = @transform_2, window_bounds = array<i64: 8, 128>}, {transform_indices = @transform_3, window_bounds = array<i64: 8, 128>}, {transform_indices = @transform_4, window_bounds = array<i64: 8, 128>}]} {
    %c0 = arith.constant 0 : index
    %0 = memref.load %arg1[%c0] : memref<2xf32, #tpu.memory_space<smem>>
    %c1 = arith.constant 1 : index
    %1 = memref.load %arg1[%c1] : memref<2xf32, #tpu.memory_space<smem>>
    %c0_0 = arith.constant 0 : index
    %c0_1 = arith.constant 0 : index
    %2 = vector.load %arg2[%c0_0, %c0_1] : memref<8x128xf32, #tpu.memory_space<vmem>>, vector<8x128xf32>
    %c0_2 = arith.constant 0 : index
    %c0_3 = arith.constant 0 : index
    %3 = vector.load %arg3[%c0_2, %c0_3] : memref<8x128xf32, #tpu.memory_space<vmem>>, vector<8x128xf32>
    %4 = arith.mulf %2, %3 : vector<8x128xf32>
    %5 = arith.mulf %2, %4 : vector<8x128xf32>
    %6 = vector.broadcast %0 : f32 to vector<8x128xf32>
    %7 = arith.mulf %6, %5 : vector<8x128xf32>
    %c0_4 = arith.constant 0 : index
    %c0_5 = arith.constant 0 : index
    %8 = vector.load %arg4[%c0_4, %c0_5] : memref<8x128xf32, #tpu.memory_space<vmem>>, vector<8x128xf32>
    tpu.vector_store %arg4[%c0_4, %c0_5], %7 {strides = array<i32>} : memref<8x128xf32, #tpu.memory_space<vmem>>, vector<8x128xf32>,
    %9 = arith.mulf %3, %4 : vector<8x128xf32>
    %10 = vector.broadcast %1 : f32 to vector<8x128xf32>
    %11 = arith.mulf %10, %9 : vector<8x128xf32>
    %c0_6 = arith.constant 0 : index
    %c0_7 = arith.constant 0 : index
    %12 = vector.load %arg5[%c0_6, %c0_7] : memref<8x128xf32, #tpu.memory_space<vmem>>, vector<8x128xf32>
    tpu.vector_store %arg5[%c0_6, %c0_7], %11 {strides = array<i32>} : memref<8x128xf32, #tpu.memory_space<vmem>>, vector<8x128xf32>,
    return
  }
  func.func @transform_0(%arg0: i32) -> i32 {
    %c0_i32 = arith.constant 0 : i32
    %c0_i32_0 = arith.constant 0 : i32
    return %c0_i32 : i32
  }
  func.func @transform_1(%arg0: i32) -> (i32, i32) {
    %c0_i32 = arith.constant 0 : i32
    %c0_i32_0 = arith.constant 0 : i32
    return %arg0, %c0_i32 : i32, i32
  }
  func.func @transform_2(%arg0: i32) -> (i32, i32) {
    %c0_i32 = arith.constant 0 : i32
    %c0_i32_0 = arith.constant 0 : i32
    return %arg0, %c0_i32 : i32, i32
  }
  func.func @transform_3(%arg0: i32) -> (i32, i32) {
    %c0_i32 = arith.constant 0 : i32
    %c0_i32_0 = arith.constant 0 : i32
    return %arg0, %c0_i32 : i32, i32
  }
  func.func @transform_4(%arg0: i32) -> (i32, i32) {
    %c0_i32 = arith.constant 0 : i32
    %c0_i32_0 = arith.constant 0 : i32
    return %arg0, %c0_i32 : i32, i32
  }
}

</mosaic_0001>

<llo_original>
// kernel: tpu_custom_call.1
$region0: #{tpu_custom_call.1}
  #allocation0 [shape = 'u32[]', space=smem, size = 0x4, offset = 0x4, fixed_abs, tag = 'smem constant byte address 0x4 - core index']
  #allocation1 [shape = 'u32[144,128]{1,0:T(1,128)}', space=vmem, size = 0x12000, scoped, tag = 'internal scratch']
  %s0 = inlined_call_operand.hbm [shape: f32[2], index: 0, kind: input, shape index: {}]
  %s1 = inlined_call_operand.hbm [shape: f32[8,128], index: 1, kind: input, shape index: {}]
  %s2 = inlined_call_operand.hbm [shape: f32[8,128], index: 2, kind: input, shape index: {}]
  %s3 = inlined_call_operand.hbm [shape: f32[8,128], index: 3, kind: output, shape index: {0}]
  %s4 = inlined_call_operand.hbm [shape: f32[8,128], index: 4, kind: output, shape index: {1}]
  %5 = xla_tuple %s3, %s4
  %s6 = sld [smem:[#allocation0]]
  $region42: #{tpu_custom_call.1} parent=0
    _
  %s8 = ssub.s32 1, %s6
  %s9 = scalar_select 0, %s8, %s6
  $region1: #{tpu_custom_call.1} parent=0
    #allocation2 [shape = 'u8[512]{0}', space=smem, size = 0x200, scoped, tag = 'input window, operand 0, single buffered']
    #allocation3 [shape = 's32[1]{0}', space=sflag, size = 0x4, scoped, tag = 'scoped memory for tpu_custom_call.1']
    #allocation4 [shape = 's32[1]{0}', space=sflag, size = 0x4, scoped, tag = 'scoped memory for tpu_custom_call.1']
    #allocation5 [shape = 's32[1]{0}', space=sflag, size = 0x4, scoped, tag = 'scoped memory for tpu_custom_call.1']
    #allocation6 [shape = 'u8[4096]{0}', space=vmem, size = 0x1000, scoped, tag = 'input window, operand 1, single buffered']
    #allocation7 [shape = 'u8[4096]{0}', space=vmem, size = 0x1000, scoped, tag = 'input window, operand 2, single buffered']
    #allocation8 [shape = 's32[1]{0}', space=sflag, size = 0x4, scoped, tag = 'scoped memory for tpu_custom_call.1']
    #allocation9 [shape = 'u8[4096]{0}', space=vmem, size = 0x1000, scoped, tag = 'output window, operand 0, single buffered']
    #allocation10 [shape = 'u8[4096]{0}', space=vmem, size = 0x1000, scoped, tag = 'output window, operand 1, single buffered']
    #allocation11 [shape = 's32[1]{0}', space=sflag, size = 0x4, scoped, tag = 'scoped memory for tpu_custom_call.1']
    %10 = vsyncpa [#allocation5], 0
    %11 = vsyncpa [#allocation3], 0
    %12 = vsyncpa [#allocation8], 0
    %13 = vsyncpa [#allocation4], 0
    %14 = vsyncpa [#allocation11], 0
    // Predicated region
    $region2: #{tpu_custom_call.1} parent=1 // pred_check
      _
    $region3: #{tpu_custom_call.1} parent=1 // pred_check_branch
      %16 = sbr.rel (0) target = $region5
    $region4: #{tpu_custom_call.1} parent=1 // pred_region
      %s18 = ssub.s32 16, 16
      %19 = vsyncadd [#allocation5], %s18
      %22 = dma.hbm_to_smem %s0, 16, [#allocation2], [#allocation5]
    $region5: #{tpu_custom_call.1} parent=1 // pred_fallthru
      _
    // Predicated region
    $region6: #{tpu_custom_call.1} parent=1 // pred_check
      _
    $region7: #{tpu_custom_call.1} parent=1 // pred_check_branch
      %24 = sbr.rel (0) target = $region9
    $region8: #{tpu_custom_call.1} parent=1 // pred_region
      %s26 = ssub.s32 128, 128
      %27 = vsyncadd [#allocation3], %s26
      %s29 = sshll.u32 [#allocation6], 4
      %s30 = int_to_ptr.vmem [resolvable:$true] %s29
      %32 = dma.hbm_to_vmem [thread:$0]  %s1, 128, %s30, [#allocation3]
    $region9: #{tpu_custom_call.1} parent=1 // pred_fallthru
      _
    // Predicated region
    $region10: #{tpu_custom_call.1} parent=1 // pred_check
      _
    $region11: #{tpu_custom_call.1} parent=1 // pred_check_branch
      %34 = sbr.rel (0) target = $region13
    $region12: #{tpu_custom_call.1} parent=1 // pred_region
      %s36 = ssub.s32 128, 128
      %37 = vsyncadd [#allocation8], %s36
      %s39 = sshll.u32 [#allocation7], 4
      %s40 = int_to_ptr.vmem [resolvable:$true] %s39
      %42 = dma.hbm_to_vmem [thread:$0]  %s2, 128, %s40, [#allocation8]
    $region13: #{tpu_custom_call.1} parent=1 // pred_fallthru
      _
    // Predicated region
    $region14: #{tpu_custom_call.1} parent=1 // pred_check
      _
    $region15: #{tpu_custom_call.1} parent=1 // pred_check_branch
      %44 = sbr.rel (0) target = $region17
    $region16: #{tpu_custom_call.1} parent=1 // pred_region
      %45 = dma.done [#allocation5], 16
    $region17: #{tpu_custom_call.1} parent=1 // pred_fallthru
      _
    // Predicated region
    $region18: #{tpu_custom_call.1} parent=1 // pred_check
      _
    $region19: #{tpu_custom_call.1} parent=1 // pred_check_branch
      %47 = sbr.rel (0) target = $region21
    $region20: #{tpu_custom_call.1} parent=1 // pred_region
      %48 = dma.done [#allocation3], 128
    $region21: #{tpu_custom_call.1} parent=1 // pred_fallthru
      _
    // Predicated region
    $region22: #{tpu_custom_call.1} parent=1 // pred_check
      _
    $region23: #{tpu_custom_call.1} parent=1 // pred_check_branch
      %50 = sbr.rel (0) target = $region25
    $region24: #{tpu_custom_call.1} parent=1 // pred_region
      %51 = dma.done [#allocation8], 128
    $region25: #{tpu_custom_call.1} parent=1 // pred_fallthru
      _
    %52 = sfence
    %s53 = sld [smem:[#allocation2]]
    %s54 = sld [smem:[#allocation2 + $0x1]]
    %v55 = vld [vmem:[#allocation6] sm:$0xff]
    %v56 = vld [vmem:[#allocation7] sm:$0xff]
    %v57 = vmul.f32 %v55, %v56
    %v58 = vmul.f32 %v55, %v57
    %v59 = vstv %s53
    %v60 = vmul.f32 %v59, %v58
    %61 = vst [vmem:[#allocation9] sm:$0xff] %v60
    %v62 = vmul.f32 %v56, %v57
    %v63 = vstv %s54
    %v64 = vmul.f32 %v63, %v62
    %65 = vst [vmem:[#allocation10] sm:$0xff] %v64
    // Predicated region
    $region26: #{tpu_custom_call.1} parent=1 // pred_check
      _
    $region27: #{tpu_custom_call.1} parent=1 // pred_check_branch
      %67 = sbr.rel (0) target = $region29
    $region28: #{tpu_custom_call.1} parent=1 // pred_region
      %s69 = ssub.s32 128, 128
      %70 = vsyncadd [#allocation4], %s69
      %s72 = sshll.u32 [#allocation9], 4
      %s73 = int_to_ptr.vmem [resolvable:$true] %s72
      %75 = dma.vmem_to_hbm [thread:$0]  %s73, 128, %s3, [#allocation4]
    $region29: #{tpu_custom_call.1} parent=1 // pred_fallthru
      _
    // Predicated region
    $region30: #{tpu_custom_call.1} parent=1 // pred_check
      _
    $region31: #{tpu_custom_call.1} parent=1 // pred_check_branch
      %77 = sbr.rel (0) target = $region33
    $region32: #{tpu_custom_call.1} parent=1 // pred_region
      %s79 = ssub.s32 128, 128
      %80 = vsyncadd [#allocation11], %s79
      %s82 = sshll.u32 [#allocation10], 4
      %s83 = int_to_ptr.vmem [resolvable:$true] %s82
      %85 = dma.vmem_to_hbm [thread:$0]  %s83, 128, %s4, [#allocation11]
    $region33: #{tpu_custom_call.1} parent=1 // pred_fallthru
      _
    // Predicated region
    $region34: #{tpu_custom_call.1} parent=1 // pred_check
      _
    $region35: #{tpu_custom_call.1} parent=1 // pred_check_branch
      %87 = sbr.rel (0) target = $region37
    $region36: #{tpu_custom_call.1} parent=1 // pred_region
      %88 = dma.done [#allocation4], 128
    $region37: #{tpu_custom_call.1} parent=1 // pred_fallthru
      _
    // Predicated region
    $region38: #{tpu_custom_call.1} parent=1 // pred_check
      _
    $region39: #{tpu_custom_call.1} parent=1 // pred_check_branch
      %90 = sbr.rel (0) target = $region41
    $region40: #{tpu_custom_call.1} parent=1 // pred_region
      %91 = dma.done [#allocation11], 128
    $region41: #{tpu_custom_call.1} parent=1 // pred_fallthru
      _
    %92 = vsyncpa [#allocation3], 1
    %93 = vsyncpa [#allocation8], 1
    %94 = vsyncpa [#allocation4], 1
    %95 = vsyncpa [#allocation11], 1
    %96 = vsyncpa [#allocation5], 1

</llo_original>
